<compile_context>
chip_gen: v6e
topology: v6e:2x2x1
jax: 0.10.0
libtpu: 0.0.40
codegen_flags: <defaults>
</compile_context>

<pallas_src>
import functools

import numpy as np
import jax
import jax.numpy as jnp
from jax.experimental import pallas as pl
from jax.experimental.pallas import tpu as pltpu


def _round_up(a, b):
    return (a + b - 1) // b * b


def _cdiv(a, b):
    return (a + b - 1) // b


def _vmem_budget_bytes():
    """~75% of this chip's physical VMEM (headroom for Mosaic scratch/sems)."""
    cap = 64 * 1024 * 1024                      # conservative (v7x-sized) fallback
    try:
        info = pltpu.get_tpu_info()
        cap = int(getattr(info, "vmem_capacity_bytes", cap) or cap)
    except Exception:
        pass
    return int(0.75 * cap)


def _vmem_limit_bytes(need, budget):
    return int(min(budget, max(32 * 1024 * 1024, 2 * need)))


# ----------------------------------------------------------------------------
# Linear MFM: out = max(x @ W1 + b1, x @ W2 + b2)
# ----------------------------------------------------------------------------
def _mfm_linear_kernel(x_ref, w_ref, b_ref, o_ref, *, c_pad):
    # x is DMA'd as f32 and cast here (cast rides the VPU under the MXU).  The
    # two weight halves live at static 128-aligned lane offsets of the packed
    # resident weight, so only a (tm, c_pad) f32 intermediate is live at once.
    xb = x_ref[...].astype(jnp.bfloat16)
    y0 = jnp.dot(xb, w_ref[:, :c_pad], preferred_element_type=jnp.float32)
    y0 = y0 + b_ref[:, :c_pad]
    y1 = jnp.dot(xb, w_ref[:, c_pad:], preferred_element_type=jnp.float32)
    y1 = y1 + b_ref[:, c_pad:]
    o_ref[...] = jnp.maximum(y0, y1)


@functools.partial(jax.jit, static_argnums=(3, 4))
def mfm_linear(x, w_packed, b_packed, out_channels, c_pad):
    """x: (M, K) f32; w_packed: (K, 2*c_pad) bf16; b_packed: (1, 2*c_pad) f32."""
    M, K = x.shape
    budget = _vmem_budget_bytes()

    # Row tile: multiple of 16 (bf16 sublane packing); 128/256-aligned when M
    # is large enough to feed the MXU rows; re-derived against the VMEM budget.
    tm_max = 1024 if budget > 80 * 1024 * 1024 else 512
    if M >= 256:
        tm = min(tm_max, _round_up(min(M, tm_max), 256))
    elif M >= 128:
        tm = 128
    else:
        tm = _round_up(M, 16)

    def vmem_need(t):
        # 2x double-buffered f32 x tile + resident packed weight/bias
        # + 2x double-buffered f32 out tile + bf16 cast + f32 temps.
        return (2 * t * K * 4 + K * 2 * c_pad * 2 + 2 * c_pad * 4
                + 2 * t * c_pad * 4 + t * K * 2 + 2 * t * c_pad * 4)

    while vmem_need(tm) > budget and tm > 16:
        tm = max(16, tm // 2)
    # NOTE: for very large K the whole-K x tile / resident weight would need a
    # K grid axis ('arbitrary') with an f32 accumulator; not needed here.

    m_pad = _round_up(M, tm)
    xp = jnp.pad(x, ((0, m_pad - M), (0, 0))) if m_pad != M else x
    steps = m_pad // tm

    x_spec = pl.BlockSpec((tm, K), lambda i: (i, 0))
    if steps >= 4 and budget > 80 * 1024 * 1024:
        # Deeper input buffering hides the x stream when HBM-bound (v5e/v6e).
        x_spec = pl.BlockSpec((tm, K), lambda i: (i, 0),
                              pipeline_mode=pl.Buffered(3))

    out = pl.pallas_call(
        functools.partial(_mfm_linear_kernel, c_pad=c_pad),
        out_shape=jax.ShapeDtypeStruct((m_pad, c_pad), jnp.float32),
        grid_spec=pltpu.PrefetchScalarGridSpec(
            num_scalar_prefetch=0,
            grid=(steps,),
            in_specs=[
                x_spec,                                                # x row tile
                pl.BlockSpec(memory_space=pltpu.MemorySpace.VMEM),     # packed W (resident)
                pl.BlockSpec(memory_space=pltpu.MemorySpace.VMEM),     # packed bias (resident)
            ],
            out_specs=pl.BlockSpec((tm, c_pad), lambda i: (i, 0)),
        ),
        compiler_params=pltpu.CompilerParams(
            dimension_semantics=("parallel",),
            vmem_limit_bytes=_vmem_limit_bytes(vmem_need(tm), budget),
        ),
    )(xp, w_packed, b_packed)
    return out[:M, :out_channels]


# ----------------------------------------------------------------------------
# Conv MFM: implicit GEMM, one fused tap-stacked matmul per row band.
# ----------------------------------------------------------------------------
def _mfm_conv_kernel(x_ref, w_ref, b_ref, o_ref, *, tap_offsets, band_l_pad, c_q):
    # x_ref: (1, 1, Cin, L_flat) bf16 — one flattened row band of one image.
    # Implicit im2col: stack the kh*kw tap slabs (static lane offsets) along
    # the contraction axis, then ONE MXU matmul with f32 accumulation.
    slab = jnp.concatenate(
        [x_ref[0, 0, :, off:off + band_l_pad] for off in tap_offsets], axis=0)
    acc = jnp.dot(w_ref[...], slab, preferred_element_type=jnp.float32)
    acc = acc + b_ref[...]                                    # (2*c_q, 1) broadcast
    o_ref[0] = jnp.maximum(acc[:c_q], acc[c_q:])              # MFM max of halves


@functools.partial(jax.jit, static_argnums=(3, 4, 5, 6, 7, 8))
def mfm_conv2d(x, w_packed, b_col, out_channels, c_q, kh, kw, stride, padding):
    """x: (B, Cin, H, W) f32 NCHW.  w_packed: (2*c_q, kh*kw*Cin) bf16, columns
    ordered (di, dj, ci).  b_col: (2*c_q, 1) f32.
    Returns (B, out_channels, H_out, W_out) f32."""
    B, Cin, H, W = x.shape
    Hp, Wp = H + 2 * padding, W + 2 * padding
    H_out = (Hp - kh) // stride + 1
    W_out = (Wp - kw) // stride + 1
    budget = _vmem_budget_bytes()

    # Output-row bands: each grid step computes `band_oh` output rows at every
    # stride-1 column position (valid strided columns sliced off in glue).
    # For stride > 1 a band is a single output row, so only the needed rows are
    # ever computed.  TODO(synk): width stride > 1 still computes ~stride extra
    # column positions per row that are sliced off afterwards.
    if stride == 1:
        band_oh = max(1, min(H_out, max(1, 512 // Wp)))
        if H_out >= 8:
            band_oh = max(1, min(band_oh, _cdiv(H_out, 4)))  # >=~4 bands: pipelining/megacore
    else:
        band_oh = 1

    kk = kh * kw

    def band_geom(boh):
        n_bands = _cdiv(H_out, boh)
        band_l = boh * Wp                        # output lanes per band
        band_l_pad = _round_up(band_l, 128)      # lane-dense, unmasked stores
        rows_g = _cdiv((kh - 1) * Wp + (kw - 1) + band_l, Wp)   # real rows needed
        l_flat = _round_up(
            max(rows_g * Wp, (kh - 1) * Wp + (kw - 1) + band_l_pad), 128)
        need = (2 * Cin * l_flat * 2                       # double-buffered bf16 band
                + 2 * c_q * kk * Cin * 2 + 2 * c_q * 4     # resident weight / bias
                + 2 * c_q * band_l_pad * 4 * 2             # double-buffered f32 out
                + kk * Cin * band_l_pad * 2 * 2            # stacked slab + slack
                + 2 * c_q * band_l_pad * 4)                # f32 acc
        return n_bands, band_l, band_l_pad, rows_g, l_flat, need

    n_bands, band_l, band_l_pad, rows_g, l_flat, need = band_geom(band_oh)
    while need > budget and band_oh > 1:
        band_oh = max(1, band_oh // 2)
        n_bands, band_l, band_l_pad, rows_g, l_flat, need = band_geom(band_oh)

    tap_offsets = tuple(di * Wp + dj for di in range(kh) for dj in range(kw))
    # Guard the static-slice / real-data bookkeeping against future rounding changes.
    assert (kh - 1) * Wp + (kw - 1) + band_l_pad <= l_flat
    assert rows_g * Wp >= (kh - 1) * Wp + (kw - 1) + band_l

    # Glue (fused into one gather/cast pass under jit): pad spatially, gather
    # every band's rows (bands overlap by kh-1 rows), flatten each band
    # row-major, lane-pad and cast to bf16.  Rows past the image are zero and
    # only feed output positions that are sliced off below.
    row_idx = (np.arange(n_bands)[:, None] * (band_oh * stride)
               + np.arange(rows_g)[None, :])                          # (n_bands, rows_g)
    hp_ext = max(Hp, int(row_idx.max()) + 1)
    xp = jnp.pad(x, ((0, 0), (0, 0),
                     (padding, padding + hp_ext - Hp),
                     (padding, padding)))                              # (B,Cin,hp_ext,Wp)
    xb = jnp.take(xp, jnp.asarray(row_idx.reshape(-1)), axis=2)        # (B,Cin,nb*rows_g,Wp)
    xb = xb.reshape(B, Cin, n_bands, rows_g * Wp)
    xb = jnp.transpose(xb, (0, 2, 1, 3))                               # (B,nb,Cin,rows_g*Wp)
    xb = jnp.pad(xb, ((0, 0), (0, 0), (0, 0), (0, l_flat - rows_g * Wp)))
    xb = xb.astype(jnp.bfloat16)

    y = pl.pallas_call(
        functools.partial(_mfm_conv_kernel, tap_offsets=tap_offsets,
                          band_l_pad=band_l_pad, c_q=c_q),
        out_shape=jax.ShapeDtypeStruct((B, c_q, n_bands * band_l_pad), jnp.float32),
        grid_spec=pltpu.PrefetchScalarGridSpec(
            num_scalar_prefetch=0,
            grid=(B, n_bands),
            in_specs=[
                pl.BlockSpec((1, 1, Cin, l_flat), lambda b, t: (b, t, 0, 0)),
                pl.BlockSpec(memory_space=pltpu.MemorySpace.VMEM),     # packed taps (resident)
                pl.BlockSpec(memory_space=pltpu.MemorySpace.VMEM),     # bias column (resident)
            ],
            out_specs=pl.BlockSpec((1, c_q, band_l_pad), lambda b, t: (b, 0, t)),
        ),
        compiler_params=pltpu.CompilerParams(
            dimension_semantics=("parallel", "parallel"),
            vmem_limit_bytes=_vmem_limit_bytes(need, budget),
        ),
    )(xb, w_packed, b_col)

    # Channel-major already: reshape + slice only, no transpose.
    y = y.reshape(B, c_q, n_bands, band_l_pad)[:, :out_channels, :, :band_l]
    y = y.reshape(B, out_channels, n_bands * band_oh, Wp)
    return y[:, :, :H_out, :(W_out - 1) * stride + 1:stride]


# ----------------------------------------------------------------------------
# MFM module equivalent (params in PyTorch layout; kernel layouts built at init).
# ----------------------------------------------------------------------------
class MFM:
    def __init__(self, in_channels, out_channels, kernel_size=3, stride=1,
                 padding=1, type="linear", *, key):
        self.out_channels = out_channels
        self.type = type
        self.stride = stride
        self.padding = padding
        self.kernel_size = kernel_size
        kw_, kb_ = jax.random.split(key)
        if type == "conv":
            fan_in = in_channels * kernel_size * kernel_size
            bound = 1.0 / (fan_in ** 0.5)
            self.weight = jax.random.uniform(
                kw_, (2 * out_channels, in_channels, kernel_size, kernel_size),
                minval=-bound, maxval=bound, dtype=jnp.float32)
            self.bias = jax.random.uniform(
                kb_, (2 * out_channels,), minval=-bound, maxval=bound,
                dtype=jnp.float32)
            # Packed ONCE at init: (2*Cq, kh*kw*Cin) bf16 with columns ordered
            # (di, dj, ci) to match the in-kernel tap stacking, halves at a
            # sublane-aligned offset Cq.
            # TODO(synk): on v7x an fp8 weight copy would halve resident VMEM.
            C, Cq = out_channels, _round_up(out_channels, 8)
            self._c_q = Cq
            w_pad = jnp.zeros((2 * Cq, in_channels, kernel_size, kernel_size),
                              jnp.float32)
            w_pad = w_pad.at[:C].set(self.weight[:C])
            w_pad = w_pad.at[Cq:Cq + C].set(self.weight[C:])
            self._w_packed = (w_pad.transpose(0, 2, 3, 1)
                              .reshape(2 * Cq, kernel_size * kernel_size * in_channels)
                              .astype(jnp.bfloat16))
            b_col = jnp.zeros((2 * Cq, 1), jnp.float32)
            b_col = b_col.at[:C, 0].set(self.bias[:C])
            b_col = b_col.at[Cq:Cq + C, 0].set(self.bias[C:])
            self._b_col = b_col
        elif type == "linear":
            fan_in = in_channels
            bound = 1.0 / (fan_in ** 0.5)
            self.weight = jax.random.uniform(
                kw_, (2 * out_channels, in_channels),
                minval=-bound, maxval=bound, dtype=jnp.float32)
            self.bias = jax.random.uniform(
                kb_, (2 * out_channels,), minval=-bound, maxval=bound,
                dtype=jnp.float32)
            # Packed ONCE at init: (K, 2*Cp) bf16, halves at a lane-aligned
            # (128) offset Cp so the in-kernel half split is vreg-aligned.
            C, Cp = out_channels, _round_up(out_channels, 128)
            self._c_pad = Cp
            w_k = jnp.zeros((in_channels, 2 * Cp), jnp.float32)
            w_k = w_k.at[:, :C].set(self.weight[:C].T)
            w_k = w_k.at[:, Cp:Cp + C].set(self.weight[C:].T)
            self._w_packed = w_k.astype(jnp.bfloat16)
            b_k = jnp.zeros((1, 2 * Cp), jnp.float32)
            b_k = b_k.at[0, :C].set(self.bias[:C])
            b_k = b_k.at[0, Cp:Cp + C].set(self.bias[C:])
            self._b_packed = b_k
        else:
            raise Exception("incorrect MFM layer type")

    def __call__(self, x):
        if self.type == "linear":
            return mfm_linear(x, self._w_packed, self._b_packed,
                              self.out_channels, self._c_pad)
        return mfm_conv2d(x, self._w_packed, self._b_col, self.out_channels,
                          self._c_q, self.kernel_size, self.kernel_size,
                          self.stride, self.padding)


# ----------------------------------------------------------------------------
# Pure-JAX f32 references (correctness check only).
# ----------------------------------------------------------------------------
def _ref_linear(x, w, b, C):
    y = x @ w.T + b
    return jnp.maximum(y[:, :C], y[:, C:])


def _ref_conv(x, w, b, C, stride, padding):
    y = jax.lax.conv_general_dilated(
        x, w, window_strides=(stride, stride),
        padding=((padding, padding), (padding, padding)),
        dimension_numbers=("NCHW", "OIHW", "NCHW"))
    y = y + b.reshape(1, -1, 1, 1)
    return jnp.maximum(y[:, :C], y[:, C:])


if __name__ == "__main__":
    key = jax.random.PRNGKey(0)
    k_lin_p, k_lin_x, k_conv_p, k_conv_x, k_s2_p, k_s2_x = jax.random.split(key, 6)

    # Tolerances loosened vs. the f32 reference because the kernels feed bf16
    # into the MXU (f32 accumulation keeps the error small).
    RTOL = ATOL = 5e-2

    # ---- linear MFM: x (8, 32), out_channels=16 -> (8, 16) ----
    lin = MFM(in_channels=32, out_channels=16, type="linear", key=k_lin_p)
    x_lin = jax.random.normal(k_lin_x, (8, 32), dtype=jnp.float32)
    out_lin = jax.block_until_ready(lin(x_lin))
    ref_lin = _ref_linear(x_lin, lin.weight, lin.bias, 16)
    assert out_lin.shape == (8, 16)
    assert jnp.allclose(out_lin, ref_lin, rtol=RTOL, atol=ATOL)

    # ---- conv MFM: x (2, 4, 16, 16), stride 1 -> (2, 8, 16, 16) ----
    conv = MFM(in_channels=4, out_channels=8, kernel_size=3, stride=1,
               padding=1, type="conv", key=k_conv_p)
    x_conv = jax.random.normal(k_conv_x, (2, 4, 16, 16), dtype=jnp.float32)
    out_conv = jax.block_until_ready(conv(x_conv))
    ref_conv = _ref_conv(x_conv, conv.weight, conv.bias, 8, 1, 1)
    assert out_conv.shape == (2, 8, 16, 16)
    assert jnp.allclose(out_conv, ref_conv, rtol=RTOL, atol=ATOL)

    # ---- conv MFM: stride 2, odd spatial: x (2, 4, 15, 15) -> (2, 8, 8, 8) ----
    conv2 = MFM(in_channels=4, out_channels=8, kernel_size=3, stride=2,
                padding=1, type="conv", key=k_s2_p)
    x_s2 = jax.random.normal(k_s2_x, (2, 4, 15, 15), dtype=jnp.float32)
    out_s2 = jax.block_until_ready(conv2(x_s2))
    ref_s2 = _ref_conv(x_s2, conv2.weight, conv2.bias, 8, 2, 1)
    assert out_s2.shape == ref_s2.shape == (2, 8, 8, 8)
    assert jnp.allclose(out_s2, ref_s2, rtol=RTOL, atol=ATOL)

    print("KERNEL_OK")
</pallas_src>

<mosaic_0001>
module attributes {stable_mosaic.version = 11 : i64} {
  func.func @_mfm_linear_kernel(%arg0: i32, %arg1: memref<16x32xf32, #tpu.memory_space<vmem>>, %arg2: memref<32x256xbf16, #tpu.memory_space<vmem>>, %arg3: memref<1x256xf32, #tpu.memory_space<vmem>>, %arg4: memref<16x128xf32, #tpu.memory_space<vmem>>) attributes {dimension_semantics = [#tpu.dimension_semantics<parallel>], iteration_bounds = array<i64: 1>, scalar_prefetch = 0 : i64, scratch_operands = 0 : i64, tpu.core_type = #tpu.core_type<tc>, window_params = [{transform_indices = @transform_0, window_bounds = array<i64: 16, 32>}, {pipeline_mode = #tpu.pipeline_mode<synchronous>, transform_indices = @transform_1, window_bounds = array<i64: 32, 256>}, {pipeline_mode = #tpu.pipeline_mode<synchronous>, transform_indices = @transform_2, window_bounds = array<i64: 1, 256>}, {transform_indices = @transform_3, window_bounds = array<i64: 16, 128>}]} {
    %c0 = arith.constant 0 : index
    %c0_0 = arith.constant 0 : index
    %0 = vector.load %arg1[%c0, %c0_0] : memref<16x32xf32, #tpu.memory_space<vmem>>, vector<16x32xf32>
    %1 = arith.truncf %0 : vector<16x32xf32> to vector<16x32xbf16>
    %c0_1 = arith.constant 0 : index
    %c0_2 = arith.constant 0 : index
    %2 = vector.load %arg2[%c0_1, %c0_2] : memref<32x256xbf16, #tpu.memory_space<vmem>>, vector<32x128xbf16>
    %cst = arith.constant dense<0.000000e+00> : vector<16x128xf32>
    %3 = tpu.matmul %1, %2, %cst {dimension_numbers = #tpu.dot_dimension_numbers<[1], [0], [0], [1], [0, 0, 1, 1], [], []>} : vector<16x32xbf16>, vector<32x128xbf16>, vector<16x128xf32> -> vector<16x128xf32>
    %c0_3 = arith.constant 0 : index
    %c0_4 = arith.constant 0 : index
    %4 = vector.load %arg3[%c0_3, %c0_4] : memref<1x256xf32, #tpu.memory_space<vmem>>, vector<1x128xf32>
    %5 = vector.broadcast %4 : vector<1x128xf32> to vector<16x128xf32>
    %6 = arith.addf %3, %5 : vector<16x128xf32>
    %c0_5 = arith.constant 0 : index
    %c128 = arith.constant 128 : index
    %7 = vector.load %arg2[%c0_5, %c128] : memref<32x256xbf16, #tpu.memory_space<vmem>>, vector<32x128xbf16>
    %cst_6 = arith.constant dense<0.000000e+00> : vector<16x128xf32>
    %8 = tpu.matmul %1, %7, %cst_6 {dimension_numbers = #tpu.dot_dimension_numbers<[1], [0], [0], [1], [0, 0, 1, 1], [], []>} : vector<16x32xbf16>, vector<32x128xbf16>, vector<16x128xf32> -> vector<16x128xf32>
    %c0_7 = arith.constant 0 : index
    %c128_8 = arith.constant 128 : index
    %9 = vector.load %arg3[%c0_7, %c128_8] : memref<1x256xf32, #tpu.memory_space<vmem>>, vector<1x128xf32>
    %10 = vector.broadcast %9 : vector<1x128xf32> to vector<16x128xf32>
    %11 = arith.addf %8, %10 : vector<16x128xf32>
    %12 = arith.maximumf %6, %11 : vector<16x128xf32>
    %c0_9 = arith.constant 0 : index
    %c0_10 = arith.constant 0 : index
    %13 = vector.load %arg4[%c0_9, %c0_10] : memref<16x128xf32, #tpu.memory_space<vmem>>, vector<16x128xf32>
    tpu.vector_store %arg4[%c0_9, %c0_10], %12 {strides = array<i32>} : memref<16x128xf32, #tpu.memory_space<vmem>>, vector<16x128xf32>,
    return
  }
  func.func @transform_0(%arg0: i32) -> (i32, i32) {
    %c0_i32 = arith.constant 0 : i32
    %c0_i32_0 = arith.constant 0 : i32
    return %arg0, %c0_i32 : i32, i32
  }
  func.func @transform_1(%arg0: i32) -> (i32, i32) {
    %c0_i32 = arith.constant 0 : i32
    %c0_i32_0 = arith.constant 0 : i32
    %c0_i32_1 = arith.constant 0 : i32
    return %c0_i32, %c0_i32_0 : i32, i32
  }
  func.func @transform_2(%arg0: i32) -> (i32, i32) {
    %c0_i32 = arith.constant 0 : i32
    %c0_i32_0 = arith.constant 0 : i32
    %c0_i32_1 = arith.constant 0 : i32
    return %c0_i32, %c0_i32_0 : i32, i32
  }
  func.func @transform_3(%arg0: i32) -> (i32, i32) {
    %c0_i32 = arith.constant 0 : i32
    %c0_i32_0 = arith.constant 0 : i32
    return %arg0, %c0_i32 : i32, i32
  }
}

</mosaic_0001>

<llo_original>
// kernel: mfm_linear.1
$region0: #{mfm_linear.1}
  #allocation0 [shape = 'u32[]', space=smem, size = 0x4, offset = 0x4, fixed_abs, tag = 'smem constant byte address 0x4 - core index']
  #allocation1 [shape = 'u32[144,128]{1,0:T(1,128)}', space=vmem, size = 0x12000, scoped, tag = 'internal scratch']
  %s0 = inlined_call_operand.vmem [shape: f32[16,32], index: 0, kind: input, shape index: {}]
  %s1 = inlined_call_operand.hbm [shape: bf16[32,256], index: 1, kind: input, shape index: {}]
  %s2 = inlined_call_operand.vmem [shape: f32[1,256], index: 2, kind: input, shape index: {}]
  %s3 = inlined_call_operand.vmem [shape: f32[16,128], index: 3, kind: output, shape index: {}]
  %s4 = sld [smem:[#allocation0]]
  $region26: #{mfm_linear.1} parent=0
    _
  %s6 = ssub.s32 1, %s4
  %s7 = scalar_select 0, %s6, %s4
  $region1: #{mfm_linear.1} parent=0
    #allocation2 [shape = 'u8[16384]{0}', space=vmem, size = 0x4000, scoped, tag = 'input window, operand 1, single buffered']
    #allocation3 [shape = 's32[1]{0}', space=sflag, size = 0x4, scoped, tag = 'scoped memory for mfm_linear.1']
    %8 = vsyncpa [#allocation3], 0
    // Predicated region
    $region2: #{mfm_linear.1} parent=1 // pred_check
      _
    $region3: #{mfm_linear.1} parent=1 // pred_check_branch
      %10 = sbr.rel (0) target = $region5
    $region4: #{mfm_linear.1} parent=1 // pred_region
      _
    $region5: #{mfm_linear.1} parent=1 // pred_fallthru
      _
    // Predicated region
    $region6: #{mfm_linear.1} parent=1 // pred_check
      _
    $region7: #{mfm_linear.1} parent=1 // pred_check_branch
      %12 = sbr.rel (0) target = $region9
    $region8: #{mfm_linear.1} parent=1 // pred_region
      %s14 = ssub.s32 512, 512
      %15 = vsyncadd [#allocation3], %s14
      %s16 = sshll.u32 [#allocation2], 4
      %s17 = int_to_ptr.vmem [resolvable:$true] %s16
      %22 = dma.hbm_to_vmem [thread:$0]  %s1, 512, %s17, [#allocation3], 128, 128, 8
    $region9: #{mfm_linear.1} parent=1 // pred_fallthru
      _
    // Predicated region
    $region10: #{mfm_linear.1} parent=1 // pred_check
      _
    $region11: #{mfm_linear.1} parent=1 // pred_check_branch
      %24 = sbr.rel (0) target = $region13
    $region12: #{mfm_linear.1} parent=1 // pred_region
      _
    $region13: #{mfm_linear.1} parent=1 // pred_fallthru
      _
    // Predicated region
    $region14: #{mfm_linear.1} parent=1 // pred_check
      _
    $region15: #{mfm_linear.1} parent=1 // pred_check_branch
      %26 = sbr.rel (0) target = $region17
    $region16: #{mfm_linear.1} parent=1 // pred_region
      %27 = dma.done [#allocation3], 512
    $region17: #{mfm_linear.1} parent=1 // pred_fallthru
      _
    %v29 = vld [vmem:[%s0] sm:$0xff]
    %v30 = vld [vmem:[%s0 + $0x8] sm:$0xff]
    %v31 = vpack.c.bf16 %v30, %v29
    %v32 = vld [vmem:[#allocation2] sm:$0xf]
    %v33 = vld [vmem:[#allocation2 + $0x8] sm:$0xf]
    %v34 = vld [vmem:[#allocation2 + $0x10] sm:$0xf]
    %v35 = vld [vmem:[#allocation2 + $0x18] sm:$0xf]
    %v36 = vld [vmem:[%s2] sm:$0x1]
    %v38 = vlaneseq
    %v39 = vshrl.u32 %v38, 7
    %v40 = vsub.s32 0, %v39
    %v41 = vrot.slane %v36, %v40
    %v47 = vunpack.c.l.b16 %v32
    %v48 = vunpack.c.l.b16 %v33
    %v49 = vunpack.c.l.b16 %v34
    %v50 = vunpack.c.l.b16 %v35
    %v51 = vpack.c.b16 %v48, %v47
    %v52 = vpack.c.b16 %v50, %v49
    %vm55 = vcmask 261120
    %v57 = vsel %vm55, %v31, 0
    %59 = vmatprep.subr.bf16.mxu0 0
    %60 = vmatpush1.bf16.msra.mxu0 0
    %61 = vmatprep.subr.bf16.mxu0 0
    %62 = vmatpush1.bf16.msra.mxu0 0
    %63 = vmatprep.subr.bf16.mxu0 0
    %64 = vmatpush1.bf16.msra.mxu0 0
    %65 = vmatprep.subr.bf16.mxu0 0
    %66 = vmatpush1.bf16.msra.mxu0 0
    %67 = vmatprep.subr.bf16.mxu0 0
    %68 = vmatpush1.bf16.msra.mxu0 0
    %69 = vmatprep.subr.bf16.mxu0 0
    %70 = vmatpush1.bf16.msra.mxu0 0
    %71 = vmatprep.subr.bf16.mxu0 0
    %72 = vmatpush1.bf16.msra.mxu0 %v52
    %73 = vmatprep.subr.bf16.mxu0 0
    %74 = vmatpush1.bf16.msra.mxu0 %v51
    %75 = vmatprep.subr.bf16.mxu0 0
    %76 = vmatpush2.bf16.msra.mxu0 0
    %77 = vmatprep.subr.bf16.mxu0 0
    %78 = vmatpush2.bf16.msra.mxu0 0
    %79 = vmatprep.subr.bf16.mxu0 0
    %80 = vmatpush2.bf16.msra.mxu0 0
    %81 = vmatprep.subr.bf16.mxu0 0
    %82 = vmatpush2.bf16.msra.mxu0 0
    %83 = vmatprep.subr.bf16.mxu0 0
    %84 = vmatpush2.bf16.msra.mxu0 0
    %85 = vmatprep.subr.bf16.mxu0 0
    %86 = vmatpush2.bf16.msra.mxu0 0
    %87 = vmatprep.subr.bf16.mxu0 0
    %88 = vmatpush2.bf16.msra.mxu0 0
    %89 = vmatprep.subr.bf16.mxu0 0
    %90 = vmatpush2.bf16.msra.mxu0 0
    %91 = vmatprep.mubr.bf16.mxu0 0
    %92 = vmatmul.mubr.bf16.gmra.mxu0 %v57
    %v93 = vpop.f32.mrf.mxu0
    %v94 = vadd.f32 %v41, %v93
    %v95 = vpop.f32.mrf.mxu0
    %v96 = vpop.f32.mrf.mxu0
    %v97 = vadd.f32 %v41, %v96
    %v98 = vpop.f32.mrf.mxu0
    %99 = vdwg.mxu0
    %v100 = vld [vmem:[#allocation2 + $0x4] sm:$0xf]
    %v101 = vld [vmem:[#allocation2 + $0xc] sm:$0xf]
    %v102 = vld [vmem:[#allocation2 + $0x14] sm:$0xf]
    %v103 = vld [vmem:[#allocation2 + $0x1c] sm:$0xf]
    %v104 = vld [vmem:[%s2 + $0x1] sm:$0x1]
    %v106 = vlaneseq
    %v107 = vshrl.u32 %v106, 7
    %v108 = vsub.s32 0, %v107
    %v109 = vrot.slane %v104, %v108
    %v115 = vunpack.c.l.b16 %v100
    %v116 = vunpack.c.l.b16 %v101
    %v117 = vunpack.c.l.b16 %v102
    %v118 = vunpack.c.l.b16 %v103
    %v119 = vpack.c.b16 %v116, %v115
    %v120 = vpack.c.b16 %v118, %v117
    %123 = vmatprep.subr.bf16.mxu0 0
    %124 = vmatpush1.bf16.msra.mxu0 0
    %125 = vmatprep.subr.bf16.mxu0 0
    %126 = vmatpush1.bf16.msra.mxu0 0
    %127 = vmatprep.subr.bf16.mxu0 0
    %128 = vmatpush1.bf16.msra.mxu0 0
    %129 = vmatprep.subr.bf16.mxu0 0
    %130 = vmatpush1.bf16.msra.mxu0 0
    %131 = vmatprep.subr.bf16.mxu0 0
    %132 = vmatpush1.bf16.msra.mxu0 0
    %133 = vmatprep.subr.bf16.mxu0 0
    %134 = vmatpush1.bf16.msra.mxu0 0
    %135 = vmatprep.subr.bf16.mxu0 0
    %136 = vmatpush1.bf16.msra.mxu0 %v120
    %137 = vmatprep.subr.bf16.mxu0 0
    %138 = vmatpush1.bf16.msra.mxu0 %v119
    %139 = vmatprep.subr.bf16.mxu0 0
    %140 = vmatpush2.bf16.msra.mxu0 0
    %141 = vmatprep.subr.bf16.mxu0 0
    %142 = vmatpush2.bf16.msra.mxu0 0
    %143 = vmatprep.subr.bf16.mxu0 0
    %144 = vmatpush2.bf16.msra.mxu0 0
    %145 = vmatprep.subr.bf16.mxu0 0
    %146 = vmatpush2.bf16.msra.mxu0 0
    %147 = vmatprep.subr.bf16.mxu0 0
    %148 = vmatpush2.bf16.msra.mxu0 0
    %149 = vmatprep.subr.bf16.mxu0 0
    %150 = vmatpush2.bf16.msra.mxu0 0
    %151 = vmatprep.subr.bf16.mxu0 0
    %152 = vmatpush2.bf16.msra.mxu0 0
    %153 = vmatprep.subr.bf16.mxu0 0
    %154 = vmatpush2.bf16.msra.mxu0 0
    %155 = vmatprep.mubr.bf16.mxu0 0
    %156 = vmatmul.mubr.bf16.gmra.mxu0 %v57
    %v157 = vpop.f32.mrf.mxu0
    %v158 = vadd.f32 %v109, %v157
    %v159 = vpop.f32.mrf.mxu0
    %v160 = vpop.f32.mrf.mxu0
    %v161 = vadd.f32 %v109, %v160
    %v162 = vpop.f32.mrf.mxu0
    %163 = vdwg.mxu0
    %v164 = vmax.f32 %v94, %v158
    %v165 = vmax.f32 %v97, %v161
    %166 = vst [vmem:[%s3] sm:$0xff] %v164
    %167 = vst [vmem:[%s3 + $0x8] sm:$0xff] %v165
    // Predicated region
    $region18: #{mfm_linear.1} parent=1 // pred_check
      _
    $region19: #{mfm_linear.1} parent=1 // pred_check_branch
      %169 = sbr.rel (0) target = $region21
    $region20: #{mfm_linear.1} parent=1 // pred_region
      _
    $region21: #{mfm_linear.1} parent=1 // pred_fallthru
      _
    // Predicated region
    $region22: #{mfm_linear.1} parent=1 // pred_check
      _
    $region23: #{mfm_linear.1} parent=1 // pred_check_branch
      %171 = sbr.rel (0) target = $region25
    $region24: #{mfm_linear.1} parent=1 // pred_region
      _
    $region25: #{mfm_linear.1} parent=1 // pred_fallthru
      _
    %172 = vsyncpa [#allocation3], 1

</llo_original>
